<compile_context>
chip_gen: v7x
topology: tpu7x:2x2x1
jax: 0.10.0
libtpu: 0.0.40
codegen_flags: <defaults>
</compile_context>

<pallas_src>
import functools

import jax
import jax.numpy as jnp
from jax.experimental import pallas as pl
from jax.experimental.pallas import tpu as pltpu


# ---------------------------------------------------------------------------
# Deterministic stand-in for ops.default_func
# ---------------------------------------------------------------------------
_UNARY_FNS = (
    lambda z: z,                    # identity  (must stay first: it seeds `out`)
    lambda z: z * z,                # square
    jnp.sin,                        # sin
    jax.nn.sigmoid,                 # sigmoid
)
_BINARY_FNS = (
    lambda a, b: a * b,             # product
    lambda a, b: a + b,             # plus
)

N_UNARY = len(_UNARY_FNS)
N_BINARY = len(_BINARY_FNS)
N_FCTS = N_UNARY + N_BINARY          # number of output features (6)
OUT_DIM = N_FCTS + N_BINARY          # width of the PyTorch weight matrix (8)


def _round_up(n, m):
    return ((n + m - 1) // m) * m


OUT_PAD = 128                        # lane-dense group width for the MXU matmul
SLAB_W = 2 * OUT_PAD                 # packed W width: [first operands | second operands]
OUT_HBM = _round_up(N_FCTS, 8)       # narrow HBM output width (8 cols, sliced to 6)
assert N_FCTS <= OUT_HBM <= OUT_PAD


# ---------------------------------------------------------------------------
# Pallas kernel: one MXU matmul + narrow-lane activations + lane-mask assembly
# ---------------------------------------------------------------------------
def _symlayer_kernel(x_ref, w_ref, out_ref):
    # Hot path: g_full = x @ W_packed. Lanes [0,128) carry unary / binary
    # first-operand columns (aligned with their OUTPUT column); lanes
    # [128,256) carry binary second operands at the SAME lane offset.
    g_full = jnp.dot(x_ref[...], w_ref[...], preferred_element_type=jnp.float32)

    # Slices start at lane offsets 0 and 128 (vreg-tile boundaries), so no
    # cross-lane shuffle is needed. Narrow (8-lane) values keep the VPU/EUP
    # epilogue ~16x cheaper than whole-128-lane-tile activations.
    g = g_full[:, :OUT_HBM]                          # (b_tile, 8)
    g_partner = g_full[:, OUT_PAD:OUT_PAD + OUT_HBM]  # (b_tile, 8)

    col = jax.lax.broadcasted_iota(jnp.int32, g.shape, dimension=1)

    # Seed `out` with the first (identity) unary: lanes >= N_FCTS have zero
    # weight columns, so the discarded columns 6-7 stay exactly 0 (finite).
    out = _UNARY_FNS[0](g)
    for j, fn in enumerate(_UNARY_FNS[1:], start=1):
        out = jnp.where(col == j, fn(g), out)
    for k, fn in enumerate(_BINARY_FNS):
        out = jnp.where(col == N_UNARY + k, fn(g, g_partner), out)

    out_ref[...] = out.astype(out_ref.dtype)


# ---------------------------------------------------------------------------
# Wrapper: weight repacking, adaptive batch tiling, narrow HBM output
# ---------------------------------------------------------------------------
def _pack_weights(W):
    """(in_dim, OUT_DIM) -> lane-dense (in_dim, 256) slab.

    col c < N_UNARY           : unary weight column c
    col N_UNARY + k           : binary k first operand  (orig col N_UNARY + 2k)
    col OUT_PAD + N_UNARY + k : binary k second operand (orig col N_UNARY + 2k + 1)
    All other columns are zero (keeps discarded output lanes finite/zero).
    """
    in_dim = W.shape[0]
    W_pad = jnp.zeros((in_dim, SLAB_W), dtype=W.dtype)
    W_pad = W_pad.at[:, :N_UNARY].set(W[:, :N_UNARY])
    for k in range(N_BINARY):
        W_pad = W_pad.at[:, N_UNARY + k].set(W[:, N_UNARY + 2 * k])
        W_pad = W_pad.at[:, OUT_PAD + N_UNARY + k].set(W[:, N_UNARY + 2 * k + 1])
    return W_pad


# Explicit scoped-VMEM request: portable across v5e (16 MiB scoped default),
# v6e (32 MiB) and v7x (64 MiB physical). The tile picker budgets below this.
_VMEM_LIMIT_BYTES = 48 * 1024 * 1024
_VMEM_TILE_BUDGET = 36 * 1024 * 1024


def _pick_b_tile(B, in_dim, itemsize):
    """Row-tile size: big (amortize ~0.35us/step), >=2 steps, VMEM-budgeted."""
    w_bytes = 2 * in_dim * SLAB_W * itemsize              # packed W (worst case 2 bufs)
    per_row = 2 * in_dim * itemsize + 2 * OUT_HBM * 4     # double-buffered x + out
    cap = max(16, (_VMEM_TILE_BUDGET - w_bytes) // per_row)
    tile_max = int(min(2048, cap))
    # At least 2 grid steps when the batch allows it (v7x has 2 TensorCores and
    # dimension_semantics=("parallel",) shards the grid across them).
    n_steps = max(2, pl.cdiv(max(B, 1), tile_max))
    tile = _round_up(pl.cdiv(max(B, 1), n_steps), 16)     # 16: f32 & bf16 sublane-safe
    return int(max(tile, 16))


@functools.partial(jax.jit, static_argnames=("b_tile",))
def symlayer_forward(x, W, *, b_tile=None):
    B, in_dim = x.shape
    assert W.shape == (in_dim, OUT_DIM)

    if b_tile is None:
        b_tile = _pick_b_tile(B, in_dim, x.dtype.itemsize)
    assert b_tile % 16 == 0

    # Pad the batch so the (parallel) grid tiles it evenly; padded rows are
    # zeros and get sliced off below.
    B_pad = _round_up(max(B, 1), b_tile)
    if B_pad != B:
        x = jnp.pad(x, ((0, B_pad - B), (0, 0)))

    # NOTE: no standalone cast of x here (that would add a full extra HBM
    # pass). The kernel consumes x in whatever dtype the producer supplies;
    # only the tiny packed W is matched to it. Accumulation stays f32.
    W_packed = _pack_weights(W).astype(x.dtype)

    grid = (B_pad // b_tile,)
    out = pl.pallas_call(
        _symlayer_kernel,
        out_shape=jax.ShapeDtypeStruct((B_pad, OUT_HBM), jnp.float32),
        grid=grid,
        in_specs=[
            pl.BlockSpec((b_tile, in_dim), lambda i: (i, 0)),
            # W is tiny; constant index_map keeps it resident in VMEM.
            pl.BlockSpec((in_dim, SLAB_W), lambda i: (0, 0)),
        ],
        # Narrow HBM output: last block dim == full array dim (8), so the
        # (8,128) rule is satisfied and write traffic is ~16x smaller than the
        # previous 128-lane padded slab.
        out_specs=pl.BlockSpec((b_tile, OUT_HBM), lambda i: (i, 0)),
        compiler_params=pltpu.CompilerParams(
            dimension_semantics=("parallel",),
            vmem_limit_bytes=_VMEM_LIMIT_BYTES,
        ),
        cost_estimate=pl.CostEstimate(
            flops=2 * B_pad * in_dim * SLAB_W + 16 * B_pad * OUT_HBM,
            transcendentals=2 * B_pad * OUT_HBM,
            bytes_accessed=(x.size * x.dtype.itemsize
                            + W_packed.size * W_packed.dtype.itemsize
                            + B_pad * OUT_HBM * 4),
        ),
    )(x, W_packed)

    # Strip batch padding and the two zero padding columns (near-free now).
    return out[:B, :N_FCTS]


# ---------------------------------------------------------------------------
# Pure-JAX reference (mirrors the PyTorch forward)
# ---------------------------------------------------------------------------
def symlayer_reference(x, W):
    g = x @ W
    outs = []
    in_i = 0
    for fn in _UNARY_FNS:
        outs.append(fn(g[:, in_i]))
        in_i += 1
    for fn in _BINARY_FNS:
        outs.append(fn(g[:, in_i], g[:, in_i + 1]))
        in_i += 2
    return jnp.stack(outs, axis=1)


if __name__ == "__main__":
    key = jax.random.PRNGKey(0)
    k_x, k_w = jax.random.split(key)

    # Small shapes; B deliberately not a multiple of the auto-picked tile so
    # the batch-padding path and the >=2-step grid are both exercised.
    B, IN_DIM = 40, 32
    x = jax.random.normal(k_x, (B, IN_DIM), dtype=jnp.float32)
    # torch.normal(mean=0.0, std=0.1, size=(in_dim, out_dim)) equivalent:
    W = 0.1 * jax.random.normal(k_w, (IN_DIM, OUT_DIM), dtype=jnp.float32)

    # f32 path
    out = symlayer_forward(x, W)
    jax.block_until_ready(out)
    ref = symlayer_reference(x, W)
    assert out.shape == (B, N_FCTS)
    assert jnp.allclose(out, ref, atol=1e-4, rtol=1e-4), "f32 mismatch vs reference"

    # bf16 input arriving already in bf16 from the producer (no standalone
    # wrapper cast); compare against a reference on the same quantized operands.
    x_bf16 = x.astype(jnp.bfloat16)
    out_bf16 = symlayer_forward(x_bf16, W)
    jax.block_until_ready(out_bf16)
    ref_bf16 = symlayer_reference(x_bf16.astype(jnp.float32),
                                  W.astype(jnp.bfloat16).astype(jnp.float32))
    assert out_bf16.shape == (B, N_FCTS)
    assert jnp.allclose(out_bf16, ref_bf16, atol=2e-2, rtol=2e-2), \
        "bf16 mismatch vs reference"

    print("KERNEL_OK")
</pallas_src>

<mosaic_0001>
module attributes {stable_mosaic.version = 11 : i64} {
  func.func @_symlayer_kernel(%arg0: i32, %arg1: memref<32x32xf32, #tpu.memory_space<vmem>>, %arg2: memref<32x256xf32, #tpu.memory_space<vmem>>, %arg3: memref<32x8xf32, #tpu.memory_space<vmem>>) attributes {dimension_semantics = [#tpu.dimension_semantics<parallel>], iteration_bounds = array<i64: 2>, scalar_prefetch = 0 : i64, scratch_operands = 0 : i64, tpu.core_type = #tpu.core_type<tc>, window_params = [{transform_indices = @transform_0, window_bounds = array<i64: 32, 32>}, {pipeline_mode = #tpu.pipeline_mode<synchronous>, transform_indices = @transform_1, window_bounds = array<i64: 32, 256>}, {transform_indices = @transform_2, window_bounds = array<i64: 32, 8>}]} {
    %c0 = arith.constant 0 : index
    %c0_0 = arith.constant 0 : index
    %0 = vector.load %arg1[%c0, %c0_0] : memref<32x32xf32, #tpu.memory_space<vmem>>, vector<32x32xf32>
    %c0_1 = arith.constant 0 : index
    %c0_2 = arith.constant 0 : index
    %1 = vector.load %arg2[%c0_1, %c0_2] : memref<32x256xf32, #tpu.memory_space<vmem>>, vector<32x256xf32>
    %cst = arith.constant dense<0.000000e+00> : vector<32x256xf32>
    %2 = tpu.matmul %0, %1, %cst {dimension_numbers = #tpu.dot_dimension_numbers<[1], [0], [0], [1], [0, 0, 1, 1], [], []>} : vector<32x32xf32>, vector<32x256xf32>, vector<32x256xf32> -> vector<32x256xf32>
    %3 = vector.extract_strided_slice %2 {offsets = [0, 0], sizes = [32, 8], strides = [1, 1]} : vector<32x256xf32> to vector<32x8xf32>
    %4 = vector.extract_strided_slice %2 {offsets = [0, 128], sizes = [32, 8], strides = [1, 1]} : vector<32x256xf32> to vector<32x8xf32>
    %5 = tpu.iota {dimensions = array<i32: 1>} : vector<32x8xi32>
    %c1_i32 = arith.constant 1 : i32
    %6 = vector.broadcast %c1_i32 : i32 to vector<32x8xi32>
    %7 = arith.cmpi eq, %5, %6 : vector<32x8xi32>
    %8 = arith.mulf %3, %3 : vector<32x8xf32>
    %9 = arith.select %7, %8, %3 : vector<32x8xi1>, vector<32x8xf32>
    %c2_i32 = arith.constant 2 : i32
    %10 = vector.broadcast %c2_i32 : i32 to vector<32x8xi32>
    %11 = arith.cmpi eq, %5, %10 : vector<32x8xi32>
    %12 = math.sin %3 : vector<32x8xf32>
    %13 = arith.select %11, %12, %9 : vector<32x8xi1>, vector<32x8xf32>
    %c3_i32 = arith.constant 3 : i32
    %14 = vector.broadcast %c3_i32 : i32 to vector<32x8xi32>
    %15 = arith.cmpi eq, %5, %14 : vector<32x8xi32>
    %16 = arith.negf %3 : vector<32x8xf32>
    %17 = math.exp %16 : vector<32x8xf32>
    %cst_3 = arith.constant 1.000000e+00 : f32
    %18 = vector.broadcast %cst_3 : f32 to vector<32x8xf32>
    %19 = arith.addf %18, %17 : vector<32x8xf32>
    %20 = arith.divf %18, %19 : vector<32x8xf32>
    %21 = arith.select %15, %20, %13 : vector<32x8xi1>, vector<32x8xf32>
    %c4_i32 = arith.constant 4 : i32
    %22 = vector.broadcast %c4_i32 : i32 to vector<32x8xi32>
    %23 = arith.cmpi eq, %5, %22 : vector<32x8xi32>
    %24 = arith.mulf %3, %4 : vector<32x8xf32>
    %25 = arith.select %23, %24, %21 : vector<32x8xi1>, vector<32x8xf32>
    %c5_i32 = arith.constant 5 : i32
    %26 = vector.broadcast %c5_i32 : i32 to vector<32x8xi32>
    %27 = arith.cmpi eq, %5, %26 : vector<32x8xi32>
    %28 = arith.addf %3, %4 : vector<32x8xf32>
    %29 = arith.select %27, %28, %25 : vector<32x8xi1>, vector<32x8xf32>
    %c0_4 = arith.constant 0 : index
    %c0_5 = arith.constant 0 : index
    %30 = vector.load %arg3[%c0_4, %c0_5] : memref<32x8xf32, #tpu.memory_space<vmem>>, vector<32x8xf32>
    tpu.vector_store %arg3[%c0_4, %c0_5], %29 {strides = array<i32>} : memref<32x8xf32, #tpu.memory_space<vmem>>, vector<32x8xf32>,
    return
  }
  func.func @transform_0(%arg0: i32) -> (i32, i32) {
    %c0_i32 = arith.constant 0 : i32
    %c0_i32_0 = arith.constant 0 : i32
    return %arg0, %c0_i32 : i32, i32
  }
  func.func @transform_1(%arg0: i32) -> (i32, i32) {
    %c0_i32 = arith.constant 0 : i32
    %c0_i32_0 = arith.constant 0 : i32
    %c0_i32_1 = arith.constant 0 : i32
    return %c0_i32, %c0_i32_0 : i32, i32
  }
  func.func @transform_2(%arg0: i32) -> (i32, i32) {
    %c0_i32 = arith.constant 0 : i32
    %c0_i32_0 = arith.constant 0 : i32
    return %arg0, %c0_i32 : i32, i32
  }
}

</mosaic_0001>

<llo_original>
// kernel: symlayer_forward.1
$region0: #{symlayer_forward.1}
  #allocation0 [shape = 'u32[]', space=smem, size = 0x4, offset = 0x4, fixed_abs, tag = 'smem constant byte address 0x4 - core index']
  #allocation1 [shape = 'u32[144,128]{1,0:T(1,128)}', space=vmem, size = 0x12000, scoped, tag = 'internal scratch']
  %s0 = inlined_call_operand.vmem [shape: f32[64,32], index: 0, kind: input, shape index: {}]
  %s1 = inlined_call_operand.vmem [shape: f32[32,256], index: 1, kind: input, shape index: {}]
  %s2 = inlined_call_operand.vmem [shape: f32[64,8], index: 2, kind: output, shape index: {}]
  %s3 = sld [smem:[#allocation0]]
  $region41: #{symlayer_forward.1} parent=0
    _
  %s5 = ssub.s32 1, %s3
  %s6 = scalar_select 0, %s5, %s3
  loop: start=0, step=1, limit=4
  $region2: #{symlayer_forward.1} parent=0 // loop_pre_header
    _
  $region3: #{symlayer_forward.1} parent=0 // loop_header
    %s8 = sphi 0, %s12
    %p9 = scmp.ge.s32.totalorder %s8, 4
    %s18 = sphi 0, %s20
    %s21 = sphi 0, %s18
    %s22 = sphi 0, %s21
    %s38 = sphi 0, %s22
    %s42 = sphi 0, %s42
    %s44 = sphi 0, %s42
    %s45 = sphi 0, %s44
    %s59 = sphi 0, %s45
    %s65 = sphi 0, %s67
    %s68 = sphi 0, %s65
    %s69 = sphi 0, %s68
    %s85 = sphi 0, %s69
  $region4: #{symlayer_forward.1} parent=0 // loop_header_branch
    %11 = sbr.rel (%p9) target = $region8
  $region5: #{symlayer_forward.1} parent=0 // loop_body
    %s13 = ssub.s32 %s8, 1
    %s14 = ssub.s32 %s8, 2
    %s15 = sadd.s32 %s8, 1
    %s16 = ssub.s32 %s8, %s15
    %p17 = scmp.eq.s32.totalorder %s16, 0
    %s19 = sadd.s32 %s18, 1
    %s20 = scalar_select %p17, %s18, %s19
    %p23 = pneg %p17
    %p24 = scmp.eq.s32.totalorder %s8, 1
    %p25 = por %p23, %p24
    %p26 = scmp.ne.s32.totalorder %s18, %s21
    %p27 = scmp.eq.s32.totalorder %s8, 0
    %p28 = por %p26, %p27
    %p29 = scmp.ne.s32.totalorder %s18, %s21
    %p30 = scmp.eq.s32.totalorder %s13, 1
    %p31 = por %p29, %p30
    %p32 = scmp.ne.s32.totalorder %s21, %s22
    %p33 = scmp.eq.s32.totalorder %s13, 0
    %p34 = por %p32, %p33
    %p35 = scmp.ne.s32.totalorder %s21, %s22
    %p36 = scmp.eq.s32.totalorder %s14, 1
    %p37 = por %p35, %p36
    %p39 = scmp.ne.s32.totalorder %s22, %s38
    %p40 = scmp.eq.s32.totalorder %s14, 0
    %p41 = por %p39, %p40
    %s43 = sadd.s32 %s42, 1
    %p46 = scmp.eq.s32.totalorder %s8, 1
    %p47 = scmp.ne.s32.totalorder %s42, %s44
    %p48 = scmp.eq.s32.totalorder %s8, 0
    %p49 = por %p47, %p48
    %p50 = scmp.ne.s32.totalorder %s42, %s44
    %p51 = scmp.eq.s32.totalorder %s13, 1
    %p52 = por %p50, %p51
    %p53 = scmp.ne.s32.totalorder %s44, %s45
    %p54 = scmp.eq.s32.totalorder %s13, 0
    %p55 = por %p53, %p54
    %p56 = scmp.ne.s32.totalorder %s44, %s45
    %p57 = scmp.eq.s32.totalorder %s14, 1
    %p58 = por %p56, %p57
    %p60 = scmp.ne.s32.totalorder %s45, %s59
    %p61 = scmp.eq.s32.totalorder %s14, 0
    %p62 = por %p60, %p61
    %s63 = ssub.s32 %s8, %s15
    %p64 = scmp.eq.s32.totalorder %s63, 0
    %s66 = sadd.s32 %s65, 1
    %s67 = scalar_select %p64, %s65, %s66
    %p70 = pneg %p64
    %p71 = scmp.eq.s32.totalorder %s8, 1
    %p72 = por %p70, %p71
    %p73 = scmp.ne.s32.totalorder %s65, %s68
    %p74 = scmp.eq.s32.totalorder %s8, 0
    %p75 = por %p73, %p74
    %p76 = scmp.ne.s32.totalorder %s65, %s68
    %p77 = scmp.eq.s32.totalorder %s13, 1
    %p78 = por %p76, %p77
    %p79 = scmp.ne.s32.totalorder %s68, %s69
    %p80 = scmp.eq.s32.totalorder %s13, 0
    %p81 = por %p79, %p80
    %p82 = scmp.ne.s32.totalorder %s68, %s69
    %p83 = scmp.eq.s32.totalorder %s14, 1
    %p84 = por %p82, %p83
    %p86 = scmp.ne.s32.totalorder %s69, %s85
    %p87 = scmp.eq.s32.totalorder %s14, 0
    %p88 = por %p86, %p87
    %p89 = scmp.le.s32.totalorder 1, %s8
    %p90 = scmp.lt.s32.totalorder %s8, 3
    %p91 = pnand %p89, %p90
    %p92 = pneg %p91
    // Predicated region
    $region9: #{symlayer_forward.1} parent=5 // pred_check
      _
    $region10: #{symlayer_forward.1} parent=5 // pred_check_branch
      %94 = sbr.rel (%p91) target = $region12
    $region11: #{symlayer_forward.1} parent=5 // pred_region
      %s95 = ssub.s32 %s8, 1
      // Predicated region
      $region13: #{symlayer_forward.1} parent=11 // pred_check
        %p96 = pneg %p55
      $region14: #{symlayer_forward.1} parent=11 // pred_check_branch
        %98 = sbr.rel (%p96) target = $region16
      $region15: #{symlayer_forward.1} parent=11 // pred_region
        _
      $region16: #{symlayer_forward.1} parent=11 // pred_fallthru
        _
    $region12: #{symlayer_forward.1} parent=5 // pred_fallthru
      _
    %p99 = scmp.lt.s32.totalorder %s8, 2
    // Predicated region
    $region17: #{symlayer_forward.1} parent=5 // pred_check
      %p100 = pneg %p99
    $region18: #{symlayer_forward.1} parent=5 // pred_check_branch
      %102 = sbr.rel (%p100) target = $region20
    $region19: #{symlayer_forward.1} parent=5 // pred_region
      // Predicated region
      $region21: #{symlayer_forward.1} parent=19 // pred_check
        %p103 = pneg %p28
      $region22: #{symlayer_forward.1} parent=19 // pred_check_branch
        %105 = sbr.rel (%p103) target = $region24
      $region23: #{symlayer_forward.1} parent=19 // pred_region
        %s106 = smul.u32 4, %s8
        %p107 = scmp.lt.s32.totalorder %s106, 7
        %s108 = scalar_select %p107, %s106, 7
        %s109 = smul.addr %s108, 8
        %s110 = scalar_lea.vmem %s0, %s109
        %s111 = smul.u32 4, %s8
      $region24: #{symlayer_forward.1} parent=19 // pred_fallthru
        _
    $region20: #{symlayer_forward.1} parent=5 // pred_fallthru
      _
    %p112 = scmp.le.s32.totalorder 1, %s8
    %p113 = scmp.lt.s32.totalorder %s8, 3
    %p114 = pnand %p112, %p113
    %p115 = pneg %p114
    // Predicated region
    $region25: #{symlayer_forward.1} parent=5 // pred_check
      _
    $region26: #{symlayer_forward.1} parent=5 // pred_check_branch
      %117 = sbr.rel (%p114) target = $region28
    $region27: #{symlayer_forward.1} parent=5 // pred_region
      %s118 = ssub.s32 %s8, 1
      %s119 = smul.u32 4, %s13
      %p120 = scmp.lt.s32.totalorder %s119, 7
      %s121 = scalar_select %p120, %s119, 7
      %s122 = smul.addr %s121, 8
      %s123 = scalar_lea.vmem %s0, %s122
      %p124 = pneg %p34
      %p125 = pneg %p31
      %p126 = pneg %p55
      %p127 = pneg %p52
      %p128 = pneg %p81
      %p129 = pneg %p78
      %s130 = smul.u32 4, %s13
      %p131 = scmp.lt.s32.totalorder %s130, 7
      %s132 = scalar_select %p131, %s130, 7
      %s133 = smul.addr %s132, 8
      %s134 = scalar_lea.vmem %s2, %s133
      %s135 = smul.u32 4, %s13
      %p136 = scmp.lt.s32.totalorder %s135, 7
      %s137 = scalar_select %p136, %s135, 7
      %s138 = smul.addr %s137, 8
      %s139 = scalar_lea.vmem %s0, %s138
      %s140 = smul.u32 4, %s13
      %s141 = smul.u32 4, %s13
      %p142 = scmp.lt.s32.totalorder %s141, 7
      %s143 = scalar_select %p142, %s141, 7
      %s144 = smul.addr %s143, 8
      %s145 = scalar_lea.vmem %s2, %s144
      %s146 = smul.u32 4, %s13
      %v147 = vld [vmem:[%s139] sm:$0xff]
      %v148 = vld [vmem:[%s139 + $0x8] sm:$0xff]
      %v149 = vld [vmem:[%s139 + $0x10] sm:$0xff]
      %v150 = vld [vmem:[%s139 + $0x18] sm:$0xff]
      %v151 = vld [vmem:[%s1] sm:$0xff]
      %v152 = vld [vmem:[%s1 + $0x8] sm:$0xff]
      %v153 = vld [vmem:[%s1 + $0x10] sm:$0xff]
      %v154 = vld [vmem:[%s1 + $0x18] sm:$0xff]
      %v155 = vld [vmem:[%s1 + $0x20] sm:$0xff]
      %v156 = vld [vmem:[%s1 + $0x28] sm:$0xff]
      %v157 = vld [vmem:[%s1 + $0x30] sm:$0xff]
      %v158 = vld [vmem:[%s1 + $0x38] sm:$0xff]
      %vm159 = vcmask 261120
      %v161 = vsel %vm159, %v147, 0
      %v164 = vsel %vm159, %v148, 0
      %v167 = vsel %vm159, %v149, 0
      %v170 = vsel %vm159, %v150, 0
      %172 = vmatprep.subr.mxu0 %v152
      %173 = vmatpush1.msra.mxu0 %v151
      %174 = vmatprep.subr.mxu0 %v154
      %175 = vmatpush1.msra.mxu0 %v153
      %176 = vmatprep.subr.mxu0 %v156
      %177 = vmatpush1.msra.mxu0 %v155
      %178 = vmatprep.subr.mxu0 %v158
      %179 = vmatpush1.msra.mxu0 %v157
      %180 = vmatprep.subr.mxu0 0.0
      %181 = vmatpush1.msra.mxu0 0.0
      %182 = vmatprep.subr.mxu0 0.0
      %183 = vmatpush1.msra.mxu0 0.0
      %184 = vmatprep.subr.mxu0 0.0
      %185 = vmatpush1.msra.mxu0 0.0
      %186 = vmatprep.subr.mxu0 0.0
      %187 = vmatpush1.msra.mxu0 0.0
      %188 = vmatprep.subr.mxu0 0.0
      %189 = vmatpush1.msra.mxu0 0.0
      %190 = vmatprep.subr.mxu0 0.0
      %191 = vmatpush1.msra.mxu0 0.0
      %192 = vmatprep.subr.mxu0 0.0
      %193 = vmatpush1.msra.mxu0 0.0
      %194 = vmatprep.subr.mxu0 0.0
      %195 = vmatpush1.msra.mxu0 0.0
      %196 = vmatprep.subr.mxu0 0.0
      %197 = vmatpush1.msra.mxu0 0.0
      %198 = vmatprep.subr.mxu0 0.0
      %199 = vmatpush1.msra.mxu0 0.0
      %200 = vmatprep.subr.mxu0 0.0
      %201 = vmatpush1.msra.mxu0 0.0
      %202 = vmatprep.subr.mxu0 0.0
      %203 = vmatpush1.msra.mxu0 0.0
      %204 = vmatprep.subr.mxu0 0.0
      %205 = vmatpush1.msra.mxu0 0.0
      %206 = vmatprep.subr.mxu0 0.0
      %207 = vmatpush1.msra.mxu0 0.0
      %208 = vmatprep.subr.mxu0 0.0
      %209 = vmatpush1.msra.mxu0 0.0
      %210 = vmatprep.subr.mxu0 0.0
      %211 = vmatpush1.msra.mxu0 0.0
      %212 = vmatprep.subr.mxu0 0.0
      %213 = vmatpush1.msra.mxu0 0.0
      %214 = vmatprep.subr.mxu0 0.0
      %215 = vmatpush1.msra.mxu0 0.0
      %216 = vmatprep.subr.mxu0 0.0
      %217 = vmatpush1.msra.mxu0 0.0
      %218 = vmatprep.subr.mxu0 0.0
      %219 = vmatpush1.msra.mxu0 0.0
      %220 = vmatprep.subr.mxu0 0.0
      %221 = vmatpush1.msra.mxu0 0.0
      %222 = vmatprep.subr.mxu0 0.0
      %223 = vmatpush1.msra.mxu0 0.0
      %224 = vmatprep.subr.mxu0 0.0
      %225 = vmatpush1.msra.mxu0 0.0
      %226 = vmatprep.subr.mxu0 0.0
      %227 = vmatpush1.msra.mxu0 0.0
      %228 = vmatprep.subr.mxu0 0.0
      %229 = vmatpush1.msra.mxu0 0.0
      %230 = vmatprep.subr.mxu0 0.0
      %231 = vmatpush1.msra.mxu0 0.0
      %232 = vmatprep.subr.mxu0 0.0
      %233 = vmatpush1.msra.mxu0 0.0
      %234 = vmatprep.subr.mxu0 0.0
      %235 = vmatpush1.msra.mxu0 0.0
      %236 = vmatprep.mubr.f32.mxu0 0.0
      %237 = vmatmul.mubr.f32.gmra.mrb[0].mxu0 %v161
      %v238 = vpop.f32.mrb[0].mxu0
      %v239 = vadd.f32 0.0, %v238
      %v240 = vpop.f32.mrb[0].mxu0
      %v241 = vadd.f32 0.0, %v240
      %242 = vmatprep.mubr.f32.mxu0 0.0
      %243 = vmatmul.mubr.f32.gmra.mrb[0].mxu0 %v164
      %v244 = vpop.f32.mrb[0].mxu0
      %v245 = vadd.f32 0.0, %v244
      %v246 = vpop.f32.mrb[0].mxu0
      %v247 = vadd.f32 0.0, %v246
      %248 = vmatprep.mubr.f32.mxu0 0.0
      %249 = vmatmul.mubr.f32.gmra.mrb[0].mxu0 %v167
      %v250 = vpop.f32.mrb[0].mxu0
      %v251 = vadd.f32 0.0, %v250
      %v252 = vpop.f32.mrb[0].mxu0
      %v253 = vadd.f32 0.0, %v252
      %254 = vmatprep.mubr.f32.mxu0 0.0
      %255 = vmatmul.mubr.f32.gmra.mrb[0].mxu0 %v170
      %v256 = vpop.f32.mrb[0].mxu0
      %v257 = vadd.f32 0.0, %v256
      %v258 = vpop.f32.mrb[0].mxu0
      %v259 = vadd.f32 0.0, %v258
      %260 = vdwg.mxu0
      %v261 = vlaneseq
      %v262 = vand.u32 %v261, 127
      %vm263 = vcmp.eq.s32.totalorder %v262, 1
      %v264 = vmul.f32 %v239, %v239
      %v265 = vmul.f32 %v245, %v245
      %v266 = vmul.f32 %v251, %v251
      %v267 = vmul.f32 %v257, %v257
      %v268 = vsel %vm263, %v264, %v239
      %v269 = vsel %vm263, %v265, %v245
      %v270 = vsel %vm263, %v266, %v251
      %v271 = vsel %vm263, %v267, %v257
      %vm272 = vcmp.eq.s32.totalorder %v262, 2
      %v273 = vand.u32 2147483647, %v239
      %vm274 = vcmp.le.f32.partialorder %v273, 0.7853982
      %vm275 = vcmp.lt.s32.totalorder %v239, 0
      %v276 = vand.u32 %v239, 2139095040
      %v277 = vshrl.u32 %v276, 23
      %v278 = vsub.s32 %v277, 127
      %v279 = vand.u32 2147483647, %v239
      %v280 = vand.u32 %v279, 8388607
      %v281 = vor.u32 %v280, 8388608
      %v282 = vsub.s32 0, %v281
      %v283 = vadd.s32 %v278, 1
      %vm284 = vcmp.gt.s32.totalorder %v283, 0
      %v285 = vsel %vm284, %v283, 0
      %v286 = vshrl.u32 %v285, 5
      %v287 = vand.u32 %v285, 31
      %v288 = vsub.s32 32, %v287
      %v289 = vshrl.u32 683565275, %v288
      %v290 = vshll.u32 683565275, %v287
      %v291 = vshrl.u32 2475754826, %v288
      %v292 = vor.u32 %v290, %v291
      %v293 = vshll.u32 2475754826, %v287
      %v294 = vshrl.u32 2131351028, %v288
      %v295 = vor.u32 %v293, %v294
      %v296 = vshll.u32 2131351028, %v287
      %v297 = vshrl.u32 2102212464, %v288
      %v298 = vor.u32 %v296, %v297
      %v299 = vshll.u32 2102212464, %v287
      %v300 = vshrl.u32 920167782, %v288
      %v301 = vor.u32 %v299, %v300
      %v302 = vshll.u32 920167782, %v287
      %v303 = vshrl.u32 1326507024, %v288
      %v304 = vor.u32 %v302, %v303
      %vm305 = vcmp.lt.s32.totalorder %v286, 1
      %vm306 = vcmp.lt.s32.totalorder %v286, 2
      %vm307 = vcmp.lt.s32.totalorder %v286, 3
      %vm308 = vcmp.lt.s32.totalorder %v286, 4
      %v309 = vsel %vm305, %v289, %v292
      %v310 = vsel %vm308, %v298, 2102212464
      %v311 = vsel %vm307, %v295, %v310
      %v312 = vsel %vm306, %v309, %v311
      %v313 = vsel %vm305, %v292, %v295
      %v314 = vsel %vm308, %v301, 920167782
      %v315 = vsel %vm307, %v298, %v314
      %v316 = vsel %vm306, %v313, %v315
      %v317 = vsel %vm305, %v295, %v298
      %v318 = vsel %vm308, %v304, 1326507024
      %v319 = vsel %vm307, %v301, %v318
      %v320 = vsel %vm306, %v317, %v319
      %v321 = vshll.u32 %v281, 8
      %v322 = vmul.u32.u64.compose %v321, %v320
      %v323 = vextract.low.u32 %v322
      %v324 = vextract.high.u32 %v322
      %v325 = vmul.u32.u64.compose %v321, %v316
      %v326 = vextract.low.u32 %v325
      %v327 = vextract.high.u32 %v325
      %v328 = vmul.u32 %v321, %v312
      %v329 = vadd.s32 %v324, %v326
      %vm330 = vc.u32 %v324, %v326
      %v331 = vadd.s32 %v327, 1
      %v332 = vsel %vm330, %v331, %v327
      %v333 = vadd.s32 %v328, %v332
      %v334 = vadd.s32 %v333, 536870912
      %v335 = vshrl.u32 %v334, 30
      %v336 = vshll.u32 %v335, 30
      %v337 = vsub.s32 %v333, %v336
      %vm338 = vcmp.lt.s32.totalorder %v337, 0
      %v339 = vsub.s32 0, %v337
      %v340 = vsel %vm338, %v339, %v337
      %v341 = vclz %v340
      %v342 = vsub.s32 %v341, 2
      %vm343 = vcmp.gt.s32.totalorder 0, %v342
      %v344 = vsel %vm343, 0, %v342
      %v345 = vsub.s32 32, %v344
      %v346 = vshll.u32 %v337, %v344
      %v347 = vshrl.u32 %v329, %v345
      %v348 = vor.u32 %v346, %v347
      %v349 = vsub.s32 4294967266, %v344
      %v350 = vadd.s32 %v349, 127
      %v351 = vshll.u32 %v350, 23
      %v352 = vor.u32 4788187, %v351
      %v353 = vand.u32 2147483647, %v352
      %v355 = vcvt.s32.f32 %v348
      %v356 = vmul.f32 %v355, %v353
      %v357 = vxor.u32 %v356, 2147483648
      %v358 = vsel %vm275, %v357, %v356
      %v359 = vsub.s32 4, %v335
      %v360 = vsel %vm275, %v359, %v335
      %v361 = vsel %vm274, %v239, %v358
      %v362 = vsel %vm274, 0, %v360
      %v363 = vcosq.f32.pop %v361
      %v364 = vsinq.f32.pop %v361
      %vm365 = vweird.f32 %v239
      %v366 = vadd.s32 %v362, 3
      %v367 = vand.u32 %v366, 3
      %vm368 = vcmp.lt.s32.totalorder %v367, 2
      %vm369 = vcmp.eq.s32.totalorder %v367, 0
      %v370 = vxor.u32 %v364, 2147483648
      %v371 = vsel %vm369, %v363, %v370
      %vm372 = vcmp.eq.s32.totalorder %v367, 2
      %v373 = vxor.u32 %v363, 2147483648
      %v374 = vsel %vm372, %v373, %v364
      %v375 = vsel %vm368, %v371, %v374
      %v376 = vsel %vm365, nan, %v375
      %v377 = vand.u32 2147483647, %v245
      %vm378 = vcmp.le.f32.partialorder %v377, 0.7853982
      %vm379 = vcmp.lt.s32.totalorder %v245, 0
      %v380 = vand.u32 %v245, 2139095040
      %v381 = vshrl.u32 %v380, 23
      %v382 = vsub.s32 %v381, 127
      %v383 = vand.u32 2147483647, %v245
      %v384 = vand.u32 %v383, 8388607
      %v385 = vor.u32 %v384, 8388608
      %v386 = vsub.s32 0, %v385
      %v387 = vadd.s32 %v382, 1
      %vm388 = vcmp.gt.s32.totalorder %v387, 0
      %v389 = vsel %vm388, %v387, 0
      %v390 = vshrl.u32 %v389, 5
      %v391 = vand.u32 %v389, 31
      %v392 = vsub.s32 32, %v391
      %v393 = vshrl.u32 683565275, %v392
      %v394 = vshll.u32 683565275, %v391
      %v395 = vshrl.u32 2475754826, %v392
      %v396 = vor.u32 %v394, %v395
      %v397 = vshll.u32 2475754826, %v391
      %v398 = vshrl.u32 2131351028, %v392
      %v399 = vor.u32 %v397, %v398
      %v400 = vshll.u32 2131351028, %v391
      %v401 = vshrl.u32 2102212464, %v392
      %v402 = vor.u32 %v400, %v401
      %v403 = vshll.u32 2102212464, %v391
      %v404 = vshrl.u32 920167782, %v392
      %v405 = vor.u32 %v403, %v404
      %v406 = vshll.u32 920167782, %v391
      %v407 = vshrl.u32 1326507024, %v392
      %v408 = vor.u32 %v406, %v407
      %vm409 = vcmp.lt.s32.totalorder %v390, 1
      %vm410 = vcmp.lt.s32.totalorder %v390, 2
      %vm411 = vcmp.lt.s32.totalorder %v390, 3
      %vm412 = vcmp.lt.s32.totalorder %v390, 4
      %v413 = vsel %vm409, %v393, %v396
      %v414 = vsel %vm412, %v402, 2102212464
      %v415 = vsel %vm411, %v399, %v414
      %v416 = vsel %vm410, %v413, %v415
      %v417 = vsel %vm409, %v396, %v399
      %v418 = vsel %vm412, %v405, 920167782
      %v419 = vsel %vm411, %v402, %v418
      %v420 = vsel %vm410, %v417, %v419
      %v421 = vsel %vm409, %v399, %v402
      %v422 = vsel %vm412, %v408, 1326507024
      %v423 = vsel %vm411, %v405, %v422
      %v424 = vsel %vm410, %v421, %v423
      %v425 = vshll.u32 %v385, 8
      %v426 = vmul.u32.u64.compose %v425, %v424
      %v427 = vextract.low.u32 %v426
      %v428 = vextract.high.u32 %v426
      %v429 = vmul.u32.u64.compose %v425, %v420
      %v430 = vextract.low.u32 %v429
      %v431 = vextract.high.u32 %v429
      %v432 = vmul.u32 %v425, %v416
      %v433 = vadd.s32 %v428, %v430
      %vm434 = vc.u32 %v428, %v430
      %v435 = vadd.s32 %v431, 1
      %v436 = vsel %vm434, %v435, %v431
      %v437 = vadd.s32 %v432, %v436
      %v438 = vadd.s32 %v437, 536870912
      %v439 = vshrl.u32 %v438, 30
      %v440 = vshll.u32 %v439, 30
      %v441 = vsub.s32 %v437, %v440
      %vm442 = vcmp.lt.s32.totalorder %v441, 0
      %v443 = vsub.s32 0, %v441
      %v444 = vsel %vm442, %v443, %v441
      %v445 = vclz %v444
      %v446 = vsub.s32 %v445, 2
      %vm447 = vcmp.gt.s32.totalorder 0, %v446
      %v448 = vsel %vm447, 0, %v446
      %v449 = vsub.s32 32, %v448
      %v450 = vshll.u32 %v441, %v448
      %v451 = vshrl.u32 %v433, %v449
      %v452 = vor.u32 %v450, %v451
      %v453 = vsub.s32 4294967266, %v448
      %v454 = vadd.s32 %v453, 127
      %v455 = vshll.u32 %v454, 23
      %v456 = vor.u32 4788187, %v455
      %v457 = vand.u32 2147483647, %v456
      %v459 = vcvt.s32.f32 %v452
      %v460 = vmul.f32 %v459, %v457
      %v461 = vxor.u32 %v460, 2147483648
      %v462 = vsel %vm379, %v461, %v460
      %v463 = vsub.s32 4, %v439
      %v464 = vsel %vm379, %v463, %v439
      %v465 = vsel %vm378, %v245, %v462
      %v466 = vsel %vm378, 0, %v464
      %v467 = vcosq.f32.pop %v465
      %v468 = vsinq.f32.pop %v465
      %vm469 = vweird.f32 %v245
      %v470 = vadd.s32 %v466, 3
      %v471 = vand.u32 %v470, 3
      %vm472 = vcmp.lt.s32.totalorder %v471, 2
      %vm473 = vcmp.eq.s32.totalorder %v471, 0
      %v474 = vxor.u32 %v468, 2147483648
      %v475 = vsel %vm473, %v467, %v474
      %vm476 = vcmp.eq.s32.totalorder %v471, 2
      %v477 = vxor.u32 %v467, 2147483648
      %v478 = vsel %vm476, %v477, %v468
      %v479 = vsel %vm472, %v475, %v478
      %v480 = vsel %vm469, nan, %v479
      %v481 = vand.u32 2147483647, %v251
      %vm482 = vcmp.le.f32.partialorder %v481, 0.7853982
      %vm483 = vcmp.lt.s32.totalorder %v251, 0
      %v484 = vand.u32 %v251, 2139095040
      %v485 = vshrl.u32 %v484, 23
      %v486 = vsub.s32 %v485, 127
      %v487 = vand.u32 2147483647, %v251
      %v488 = vand.u32 %v487, 8388607
      %v489 = vor.u32 %v488, 8388608
      %v490 = vsub.s32 0, %v489
      %v491 = vadd.s32 %v486, 1
      %vm492 = vcmp.gt.s32.totalorder %v491, 0
      %v493 = vsel %vm492, %v491, 0
      %v494 = vshrl.u32 %v493, 5
      %v495 = vand.u32 %v493, 31
      %v496 = vsub.s32 32, %v495
      %v497 = vshrl.u32 683565275, %v496
      %v498 = vshll.u32 683565275, %v495
      %v499 = vshrl.u32 2475754826, %v496
      %v500 = vor.u32 %v498, %v499
      %v501 = vshll.u32 2475754826, %v495
      %v502 = vshrl.u32 2131351028, %v496
      %v503 = vor.u32 %v501, %v502
      %v504 = vshll.u32 2131351028, %v495
      %v505 = vshrl.u32 2102212464, %v496
      %v506 = vor.u32 %v504, %v505
      %v507 = vshll.u32 2102212464, %v495
      %v508 = vshrl.u32 920167782, %v496
      %v509 = vor.u32 %v507, %v508
      %v510 = vshll.u32 920167782, %v495
      %v511 = vshrl.u32 1326507024, %v496
      %v512 = vor.u32 %v510, %v511
      %vm513 = vcmp.lt.s32.totalorder %v494, 1
      %vm514 = vcmp.lt.s32.totalorder %v494, 2
      %vm515 = vcmp.lt.s32.totalorder %v494, 3
      %vm516 = vcmp.lt.s32.totalorder %v494, 4
      %v517 = vsel %vm513, %v497, %v500
      %v518 = vsel %vm516, %v506, 2102212464
      %v519 = vsel %vm515, %v503, %v518
      %v520 = vsel %vm514, %v517, %v519
      %v521 = vsel %vm513, %v500, %v503
      %v522 = vsel %vm516, %v509, 920167782
      %v523 = vsel %vm515, %v506, %v522
      %v524 = vsel %vm514, %v521, %v523
      %v525 = vsel %vm513, %v503, %v506
      %v526 = vsel %vm516, %v512, 1326507024
      %v527 = vsel %vm515, %v509, %v526
      %v528 = vsel %vm514, %v525, %v527
      %v529 = vshll.u32 %v489, 8
      %v530 = vmul.u32.u64.compose %v529, %v528
      %v531 = vextract.low.u32 %v530
      %v532 = vextract.high.u32 %v530
      %v533 = vmul.u32.u64.compose %v529, %v524
      %v534 = vextract.low.u32 %v533
      %v535 = vextract.high.u32 %v533
      %v536 = vmul.u32 %v529, %v520
      %v537 = vadd.s32 %v532, %v534
      %vm538 = vc.u32 %v532, %v534
      %v539 = vadd.s32 %v535, 1
      %v540 = vsel %vm538, %v539, %v535
      %v541 = vadd.s32 %v536, %v540
      %v542 = vadd.s32 %v541, 536870912
      %v543 = vshrl.u32 %v542, 30
      %v544 = vshll.u32 %v543, 30
      %v545 = vsub.s32 %v541, %v544
      %vm546 = vcmp.lt.s32.totalorder %v545, 0
      %v547 = vsub.s32 0, %v545
      %v548 = vsel %vm546, %v547, %v545
      %v549 = vclz %v548
      %v550 = vsub.s32 %v549, 2
      %vm551 = vcmp.gt.s32.totalorder 0, %v550
      %v552 = vsel %vm551, 0, %v550
      %v553 = vsub.s32 32, %v552
      %v554 = vshll.u32 %v545, %v552
      %v555 = vshrl.u32 %v537, %v553
      %v556 = vor.u32 %v554, %v555
      %v557 = vsub.s32 4294967266, %v552
      %v558 = vadd.s32 %v557, 127
      %v559 = vshll.u32 %v558, 23
      %v560 = vor.u32 4788187, %v559
      %v561 = vand.u32 2147483647, %v560
      %v563 = vcvt.s32.f32 %v556
      %v564 = vmul.f32 %v563, %v561
      %v565 = vxor.u32 %v564, 2147483648
      %v566 = vsel %vm483, %v565, %v564
      %v567 = vsub.s32 4, %v543
      %v568 = vsel %vm483, %v567, %v543
      %v569 = vsel %vm482, %v251, %v566
      %v570 = vsel %vm482, 0, %v568
      %v571 = vcosq.f32.pop %v569
      %v572 = vsinq.f32.pop %v569
      %vm573 = vweird.f32 %v251
      %v574 = vadd.s32 %v570, 3
      %v575 = vand.u32 %v574, 3
      %vm576 = vcmp.lt.s32.totalorder %v575, 2
      %vm577 = vcmp.eq.s32.totalorder %v575, 0
      %v578 = vxor.u32 %v572, 2147483648
      %v579 = vsel %vm577, %v571, %v578
      %vm580 = vcmp.eq.s32.totalorder %v575, 2
      %v581 = vxor.u32 %v571, 2147483648
      %v582 = vsel %vm580, %v581, %v572
      %v583 = vsel %vm576, %v579, %v582
      %v584 = vsel %vm573, nan, %v583
      %v585 = vand.u32 2147483647, %v257
      %vm586 = vcmp.le.f32.partialorder %v585, 0.7853982
      %vm587 = vcmp.lt.s32.totalorder %v257, 0
      %v588 = vand.u32 %v257, 2139095040
      %v589 = vshrl.u32 %v588, 23
      %v590 = vsub.s32 %v589, 127
      %v591 = vand.u32 2147483647, %v257
      %v592 = vand.u32 %v591, 8388607
      %v593 = vor.u32 %v592, 8388608
      %v594 = vsub.s32 0, %v593
      %v595 = vadd.s32 %v590, 1
      %vm596 = vcmp.gt.s32.totalorder %v595, 0
      %v597 = vsel %vm596, %v595, 0
      %v598 = vshrl.u32 %v597, 5
      %v599 = vand.u32 %v597, 31
      %v600 = vsub.s32 32, %v599
      %v601 = vshrl.u32 683565275, %v600
      %v602 = vshll.u32 683565275, %v599
      %v603 = vshrl.u32 2475754826, %v600
      %v604 = vor.u32 %v602, %v603
      %v605 = vshll.u32 2475754826, %v599
      %v606 = vshrl.u32 2131351028, %v600
      %v607 = vor.u32 %v605, %v606
      %v608 = vshll.u32 2131351028, %v599
      %v609 = vshrl.u32 2102212464, %v600
      %v610 = vor.u32 %v608, %v609
      %v611 = vshll.u32 2102212464, %v599
      %v612 = vshrl.u32 920167782, %v600
      %v613 = vor.u32 %v611, %v612
      %v614 = vshll.u32 920167782, %v599
      %v615 = vshrl.u32 1326507024, %v600
      %v616 = vor.u32 %v614, %v615
      %vm617 = vcmp.lt.s32.totalorder %v598, 1
      %vm618 = vcmp.lt.s32.totalorder %v598, 2
      %vm619 = vcmp.lt.s32.totalorder %v598, 3
      %vm620 = vcmp.lt.s32.totalorder %v598, 4
      %v621 = vsel %vm617, %v601, %v604
      %v622 = vsel %vm620, %v610, 2102212464
      %v623 = vsel %vm619, %v607, %v622
      %v624 = vsel %vm618, %v621, %v623
      %v625 = vsel %vm617, %v604, %v607
      %v626 = vsel %vm620, %v613, 920167782
      %v627 = vsel %vm619, %v610, %v626
      %v628 = vsel %vm618, %v625, %v627
      %v629 = vsel %vm617, %v607, %v610
      %v630 = vsel %vm620, %v616, 1326507024
      %v631 = vsel %vm619, %v613, %v630
      %v632 = vsel %vm618, %v629, %v631
      %v633 = vshll.u32 %v593, 8
      %v634 = vmul.u32.u64.compose %v633, %v632
      %v635 = vextract.low.u32 %v634
      %v636 = vextract.high.u32 %v634
      %v637 = vmul.u32.u64.compose %v633, %v628
      %v638 = vextract.low.u32 %v637
      %v639 = vextract.high.u32 %v637
      %v640 = vmul.u32 %v633, %v624
      %v641 = vadd.s32 %v636, %v638
      %vm642 = vc.u32 %v636, %v638
      %v643 = vadd.s32 %v639, 1
      %v644 = vsel %vm642, %v643, %v639
      %v645 = vadd.s32 %v640, %v644
      %v646 = vadd.s32 %v645, 536870912
      %v647 = vshrl.u32 %v646, 30
      %v648 = vshll.u32 %v647, 30
      %v649 = vsub.s32 %v645, %v648
      %vm650 = vcmp.lt.s32.totalorder %v649, 0
      %v651 = vsub.s32 0, %v649
      %v652 = vsel %vm650, %v651, %v649
      %v653 = vclz %v652
      %v654 = vsub.s32 %v653, 2
      %vm655 = vcmp.gt.s32.totalorder 0, %v654
      %v656 = vsel %vm655, 0, %v654
      %v657 = vsub.s32 32, %v656
      %v658 = vshll.u32 %v649, %v656
      %v659 = vshrl.u32 %v641, %v657
      %v660 = vor.u32 %v658, %v659
      %v661 = vsub.s32 4294967266, %v656
      %v662 = vadd.s32 %v661, 127
      %v663 = vshll.u32 %v662, 23
      %v664 = vor.u32 4788187, %v663
      %v665 = vand.u32 2147483647, %v664
      %v667 = vcvt.s32.f32 %v660
      %v668 = vmul.f32 %v667, %v665
      %v669 = vxor.u32 %v668, 2147483648
      %v670 = vsel %vm587, %v669, %v668
      %v671 = vsub.s32 4, %v647
      %v672 = vsel %vm587, %v671, %v647
      %v673 = vsel %vm586, %v257, %v670
      %v674 = vsel %vm586, 0, %v672
      %v675 = vcosq.f32.pop %v673
      %v676 = vsinq.f32.pop %v673
      %vm677 = vweird.f32 %v257
      %v678 = vadd.s32 %v674, 3
      %v679 = vand.u32 %v678, 3
      %vm680 = vcmp.lt.s32.totalorder %v679, 2
      %vm681 = vcmp.eq.s32.totalorder %v679, 0
      %v682 = vxor.u32 %v676, 2147483648
      %v683 = vsel %vm681, %v675, %v682
      %vm684 = vcmp.eq.s32.totalorder %v679, 2
      %v685 = vxor.u32 %v675, 2147483648
      %v686 = vsel %vm684, %v685, %v676
      %v687 = vsel %vm680, %v683, %v686
      %v688 = vsel %vm677, nan, %v687
      %v689 = vsel %vm272, %v376, %v268
      %v690 = vsel %vm272, %v480, %v269
      %v691 = vsel %vm272, %v584, %v270
      %v692 = vsel %vm272, %v688, %v271
      %vm693 = vcmp.eq.s32.totalorder %v262, 3
      %v694 = vxor.u32 %v239, 2147483648
      %v695 = vxor.u32 %v245, 2147483648
      %v696 = vxor.u32 %v251, 2147483648
      %v697 = vxor.u32 %v257, 2147483648
      %v698 = vmul.f32 %v694, 1.442695
      %v699 = vpow.pop %v698
      %v700 = vmul.f32 %v695, 1.442695
      %v701 = vpow.pop %v700
      %v702 = vmul.f32 %v696, 1.442695
      %v703 = vpow.pop %v702
      %v704 = vmul.f32 %v697, 1.442695
      %v705 = vpow.pop %v704
      %v706 = vadd.f32 %v699, 1.0
      %v707 = vadd.f32 %v701, 1.0
      %v708 = vadd.f32 %v703, 1.0
      %v709 = vadd.f32 %v705, 1.0
      %v710 = vrcp.pop %v706
      %v711 = vmul.f32 1.0, %v710
      %v712 = vrcp.pop %v707
      %v713 = vmul.f32 1.0, %v712
      %v714 = vrcp.pop %v708
      %v715 = vmul.f32 1.0, %v714
      %v716 = vrcp.pop %v709
      %v717 = vmul.f32 1.0, %v716
      %v718 = vsel %vm693, %v711, %v689
      %v719 = vsel %vm693, %v713, %v690
      %v720 = vsel %vm693, %v715, %v691
      %v721 = vsel %vm693, %v717, %v692
      %vm722 = vcmp.eq.s32.totalorder %v262, 4
      %v723 = vmul.f32 %v239, %v241
      %v724 = vmul.f32 %v245, %v247
      %v725 = vmul.f32 %v251, %v253
      %v726 = vmul.f32 %v257, %v259
      %v727 = vsel %vm722, %v723, %v718
      %v728 = vsel %vm722, %v724, %v719
      %v729 = vsel %vm722, %v725, %v720
      %v730 = vsel %vm722, %v726, %v721
      %vm731 = vcmp.eq.s32.totalorder %v262, 5
      %v732 = vadd.f32 %v239, %v241
      %v733 = vadd.f32 %v245, %v247
      %v734 = vadd.f32 %v251, %v253
      %v735 = vadd.f32 %v257, %v259
      %v736 = vsel %vm731, %v732, %v727
      %v737 = vsel %vm731, %v733, %v728
      %v738 = vsel %vm731, %v734, %v729
      %v739 = vsel %vm731, %v735, %v730
      %vm740 = vcmask 64512
      %741 = vst.msk [vmem:[%s145] sm:$0xff] %vm740, %v736
      %742 = vst.msk [vmem:[%s145 + $0x8] sm:$0xff] %vm740, %v737
      %743 = vst.msk [vmem:[%s145 + $0x10] sm:$0xff] %vm740, %v738
      %744 = vst.msk [vmem:[%s145 + $0x18] sm:$0xff] %vm740, %v739
      %s745 = smul.u32 4, %s13
      %p746 = scmp.lt.s32.totalorder %s745, 7
      %s747 = scalar_select %p746, %s745, 7
      %s748 = smul.addr %s747, 8
      %s749 = scalar_lea.vmem %s2, %s748
      // Predicated region
      $region29: #{symlayer_forward.1} parent=27 // pred_check
        %p750 = pneg %p78
      $region30: #{symlayer_forward.1} parent=27 // pred_check_branch
        %752 = sbr.rel (%p750) target = $region32
      $region31: #{symlayer_forward.1} parent=27 // pred_region
        %s753 = smul.u32 4, %s13
      $region32: #{symlayer_forward.1} parent=27 // pred_fallthru
        _
    $region28: #{symlayer_forward.1} parent=5 // pred_fallthru
      _
    %p754 = scmp.le.s32.totalorder 2, %s8
    // Predicated region
    $region33: #{symlayer_forward.1} parent=5 // pred_check
      %p755 = pneg %p754
    $region34: #{symlayer_forward.1} parent=5 // pred_check_branch
      %757 = sbr.rel (%p755) target = $region36
    $region35: #{symlayer_forward.1} parent=5 // pred_region
      %s758 = ssub.s32 %s8, 2
      // Predicated region
      $region37: #{symlayer_forward.1} parent=35 // pred_check
        %p759 = pneg %p84
      $region38: #{symlayer_forward.1} parent=35 // pred_check_branch
        %761 = sbr.rel (%p759) target = $region40
      $region39: #{symlayer_forward.1} parent=35 // pred_region
        %s762 = smul.u32 4, %s14
        %p763 = scmp.lt.s32.totalorder %s762, 7
        %s764 = scalar_select %p763, %s762, 7
        %s765 = smul.addr %s764, 8
        %s766 = scalar_lea.vmem %s2, %s765
      $region40: #{symlayer_forward.1} parent=35 // pred_fallthru
        _
    $region36: #{symlayer_forward.1} parent=5 // pred_fallthru
      _
  $region6: #{symlayer_forward.1} parent=0 // loop_footer
    %s12 = sadd.s32 1, %s8
  $region7: #{symlayer_forward.1} parent=0 // loop_footer_branch
    %7 = sbr.rel target = $region3
  $region8: #{symlayer_forward.1} parent=0 // loop_exit
    _

</llo_original>
